<compile_context>
chip_gen: v7x
topology: tpu7x:2x2x1
jax: 0.10.0
libtpu: 0.0.40
codegen_flags: <defaults>
</compile_context>

<pallas_src>
import functools

import numpy as np
import jax
import jax.numpy as jnp
from jax import lax
from jax.experimental import pallas as pl
from jax.experimental.pallas import tpu as pltpu


def _round_up(x, m):
    return ((x + m - 1) // m) * m


def _base_offsets(glimpse_size, radius, log_polar):
    """Batch-independent integer sampling offsets from the (integer) center.

    cv.warpPolar builds dst->src maps with mag(rho)=exp(rho*log(maxR)/G)-1 (log) or
    rho*maxR/G (linear) and angle(phi)=2*pi*phi/G, then remaps with NEAREST.  Because the
    center is an integer, round(mag*cos + cx) == round(mag*cos) + cx, so the offsets are
    batch independent.  Returns dx, dy of shape (G, G) indexed [phi, rho]
    (dest row = angle, dest col = radius).
    """
    G = glimpse_size
    phi = np.arange(G, dtype=np.float32)[:, None]
    rho = np.arange(G, dtype=np.float32)[None, :]
    if log_polar:
        mag = np.exp(rho * np.float32(np.log(float(radius)) / G)) - np.float32(1.0)
    else:
        mag = rho * np.float32(float(radius) / G)
    ang = phi * np.float32(2.0 * np.pi / G)
    dx = np.round((mag * np.cos(ang)).astype(np.float32)).astype(np.int32)
    dy = np.round((mag * np.sin(ang)).astype(np.float32)).astype(np.int32)
    return dx, dy


def _window_block_start(cy, radius, H, RB, NBLK):
    """Block index (units of RB rows) of the per-batch row window.

    Pure integer math shared by the image index_map and the kernel body so they always agree.
    The window [blk*RB, blk*RB + NBLK*RB) is clamped inside the image and covers every row in
    [max(0, cy-radius), min(H-1, cy+radius)].
    """
    if NBLK * RB >= H:
        return 0                                             # full-image fallback
    max_blk = H // RB - NBLK
    return jnp.minimum(jnp.maximum(cy - radius, 0) // RB, max_blk)


def _logpolar_kernel(centers_ref, table_ref, img_ref, out_ref, colhot_ref, *,
                     H, W, RB, NBLK, radius, replication_padding):
    b = pl.program_id(0)
    r = pl.program_id(1)

    C = img_ref.shape[0]
    gg_pad = table_ref.shape[1]

    cx = centers_ref[b, 0]
    cy = centers_ref[b, 1]

    dx = table_ref[0:1, :]                                    # (1, GG_pad) int32
    dy = table_ref[1:2, :]
    ix = dx + cx
    iy = dy + cy

    if replication_padding:
        # Edge-replication padding == clamp into the original image; outliers are judged
        # against the padded bounds (the padded-image center is (cx+radius, cy+radius)).
        ix_s = jnp.clip(ix, 0, W - 1)
        iy_s = jnp.clip(iy, 0, H - 1)
        valid = ((ix >= -radius) & (ix <= W - 1 + radius) &
                 (iy >= -radius) & (iy <= H - 1 + radius))
    else:
        # No clamp needed: out-of-image indices simply never match a one-hot
        # (WARP_FILL_OUTLIERS -> 0).  The padded-table sentinel also never matches.
        ix_s, iy_s, valid = ix, iy, None

    # ---- hoisted per-batch work: column one-hot + output zeroing ----
    @pl.when(r == 0)
    def _():
        x_iota = lax.broadcasted_iota(jnp.int32, (W, gg_pad), 0)
        colhot_ref[...] = (x_iota == ix_s).astype(jnp.float32)   # (W, GG_pad)
        out_ref[...] = jnp.zeros_like(out_ref)

    # ---- stage 1 (MXU): column gather for this window row block ----
    # img (C, RB, W) viewed as (C*RB, W), contracted over the full width against the per-batch
    # column one-hot -> (C*RB, GG_pad); lane-dense in the glimpse axis.
    img2d = img_ref[...].astype(jnp.float32).reshape(C * RB, W)
    tmp = jnp.dot(img2d, colhot_ref[...], preferred_element_type=jnp.float32)

    # ---- stage 2 (VPU + sublane reduce): pick the matching row of this window block ----
    y0 = _window_block_start(cy, radius, H, RB, NBLK) * RB + r * RB
    iy_rel = iy_s - y0                                         # (1, GG_pad) scalar shift
    y_iota = lax.broadcasted_iota(jnp.int32, (RB, gg_pad), 0)  # grid-step invariant
    rowhit = y_iota == iy_rel
    if valid is not None:
        rowhit = rowhit & valid
    rowhot = rowhit.astype(jnp.float32)                        # (RB, GG_pad)

    for c in range(C):                                         # C is tiny (1 or 3), unrolled
        part = tmp[c * RB:(c + 1) * RB, :] * rowhot
        out_ref[c:c + 1, :] += jnp.sum(part, axis=0, keepdims=True)


def log_polar_sensor(scale_stack, location, *, glimpse_size, radius, log_polar=True,
                     replication_padding=False, row_block=8):
    """scale_stack: [B, 2, C, H, W]; location: [B, 2] in [-1, 1].  Returns [B, 1, C, G, G] f32."""
    B, S, C, H, W = scale_stack.shape
    assert S == 2, "scale_stack must stack (image, blurred_image) on dim 1"
    image_size = W        # module uses shape[-1] for both coordinates; kept for fidelity

    # Integer centers (module truncates via int()); locs >= 0 so trunc == floor.
    locs = image_size * (location + 1.0) / 2.0
    centers = jnp.trunc(locs).astype(jnp.int32)                # (B, 2)  (x, y)

    G = glimpse_size
    GG = G * G
    GG_pad = _round_up(GG, 128)                                # lane-dense glimpse axis

    # Batch-independent offset table; padded columns get an always-out-of-bounds sentinel.
    dx, dy = _base_offsets(G, radius, log_polar)
    table_np = np.full((2, GG_pad), np.int32(2 ** 20), dtype=np.int32)
    table_np[0, :GG] = dx.reshape(-1)
    table_np[1, :GG] = dy.reshape(-1)
    table = jnp.asarray(table_np)

    # Row window around the center: the sampled disc only touches rows [cy-radius, cy+radius],
    # so DMA bytes and MXU work scale with ~2*radius+1 instead of H.  Fall back to the full
    # image when the aligned window would not fit.
    RB = row_block
    NBLK = -(-(2 * radius + RB) // RB)                         # cdiv: rows incl. align slack
    if not (H % RB == 0 and NBLK * RB <= H):
        RB, NBLK = H, 1                                        # full-image fallback

    kernel = functools.partial(
        _logpolar_kernel, H=H, W=W, RB=RB, NBLK=NBLK, radius=radius,
        replication_padding=replication_padding)

    def img_index_map(b, r, centers_ref):
        # Data-dependent row window; scale index 1 (blurred) is selected here, so no XLA-side
        # slice of scale_stack is ever materialized.
        blk0 = _window_block_start(centers_ref[b, 1], radius, H, RB, NBLK)
        return (b, 1, 0, blk0 + r, 0)

    grid_spec = pltpu.PrefetchScalarGridSpec(
        num_scalar_prefetch=1,                                 # centers -> SMEM (index_maps too)
        grid=(B, NBLK),
        in_specs=[
            pl.BlockSpec((2, GG_pad), lambda b, r, c: (0, 0)),            # offset table
            pl.BlockSpec((None, None, C, RB, W), img_index_map),          # windowed image rows
        ],
        out_specs=pl.BlockSpec((None, C, GG_pad), lambda b, r, c: (b, 0, 0)),
        scratch_shapes=[pltpu.VMEM((W, GG_pad), jnp.float32)],            # per-batch column one-hot
    )

    cost = pl.CostEstimate(
        flops=2 * B * NBLK * (C * RB) * W * GG_pad,
        transcendentals=0,
        bytes_accessed=int(B * NBLK * C * RB * W * 4 + B * C * GG_pad * 4
                           + 2 * GG_pad * 4 + B * 2 * 4),
    )

    out_flat = pl.pallas_call(
        kernel,
        out_shape=jax.ShapeDtypeStruct((B, C, GG_pad), jnp.float32),
        grid_spec=grid_spec,
        compiler_params=pltpu.CompilerParams(
            dimension_semantics=("parallel", "arbitrary")),
        cost_estimate=cost,
    )(centers, table, scale_stack)

    # [B, C, GG_pad] -> [B, 1, C, G, G]: slice + reshape only (no transposes).
    return out_flat[:, :, :GG].reshape(B, C, G, G)[:, None]


def _numpy_reference(scale_stack, location, glimpse_size, radius,
                     log_polar=True, replication_padding=False):
    """Pure-NumPy replica of the warpPolar(NEAREST, FILL_OUTLIERS) mapping for checking."""
    blurred = np.asarray(scale_stack)[:, 1]
    B, C, H, W = blurred.shape
    image_size = W
    locs = image_size * (np.asarray(location) + 1.0) / 2.0
    if replication_padding:
        blurred = np.pad(blurred, ((0, 0), (0, 0), (radius, radius), (radius, radius)),
                         mode="edge")
        locs = locs + radius
        H += 2 * radius
        W += 2 * radius
    centers = np.trunc(locs).astype(np.int32)
    G = glimpse_size
    dx, dy = _base_offsets(G, radius, log_polar)
    out = np.zeros((B, 1, C, G, G), dtype=np.float32)
    for b in range(B):
        ix = dx + centers[b, 0]
        iy = dy + centers[b, 1]
        valid = (ix >= 0) & (ix < W) & (iy >= 0) & (iy < H)
        ixc = np.clip(ix, 0, W - 1)
        iyc = np.clip(iy, 0, H - 1)
        samp = blurred[b][:, iyc, ixc]                         # [C, G, G]
        out[b, 0] = samp * valid[None].astype(np.float32)
    return out


if __name__ == "__main__":
    key = jax.random.PRNGKey(0)
    k_img1, k_img2, k_loc = jax.random.split(key, 3)

    B, C, G, RADIUS = 3, 3, 8, 6

    # Deterministic locations: one random row plus two hand-picked edge cases so the
    # outlier / clamping paths are exercised.
    loc_rand = jax.random.uniform(k_loc, (1, 2), dtype=jnp.float32, minval=-1.0, maxval=1.0)
    location = jnp.concatenate(
        [loc_rand, jnp.array([[-1.0, 1.0], [0.97, -0.93]], dtype=jnp.float32)], axis=0)

    # Two image sizes: 16x16 exercises the full-image fallback path, 64x64 exercises the
    # center-windowed row-DMA path.
    stacks = {
        16: jax.random.uniform(k_img1, (B, 2, C, 16, 16), dtype=jnp.float32),
        64: jax.random.uniform(k_img2, (B, 2, C, 64, 64), dtype=jnp.float32),
    }

    configs = [
        (16, dict(log_polar=True, replication_padding=False)),
        (16, dict(log_polar=True, replication_padding=True)),
        (16, dict(log_polar=False, replication_padding=False)),
        (64, dict(log_polar=True, replication_padding=False)),
        (64, dict(log_polar=True, replication_padding=True)),
    ]
    for hs, cfg in configs:
        scale_stack = stacks[hs]
        glimpse = log_polar_sensor(scale_stack, location,
                                   glimpse_size=G, radius=RADIUS, **cfg)
        glimpse = jax.block_until_ready(glimpse)
        assert glimpse.shape == (B, 1, C, G, G), glimpse.shape
        ref = _numpy_reference(scale_stack, location, G, RADIUS, **cfg)
        np.testing.assert_allclose(np.asarray(glimpse), ref, rtol=1e-5, atol=1e-5)

    print("KERNEL_OK")
</pallas_src>

<mosaic_0001>
module attributes {stable_mosaic.version = 11 : i64} {
  func.func @_logpolar_kernel(%arg0: i32, %arg1: i32, %arg2: memref<3x2xi32, #tpu.memory_space<smem>>, %arg3: memref<2x128xi32, #tpu.memory_space<vmem>>, %arg4: memref<1x1x3x16x16xf32, #tpu.memory_space<vmem>>, %arg5: memref<1x3x128xf32, #tpu.memory_space<vmem>>, %arg6: memref<16x128xf32, #tpu.memory_space<vmem>>) attributes {dimension_semantics = [#tpu.dimension_semantics<parallel>, #tpu.dimension_semantics<arbitrary>], iteration_bounds = array<i64: 3, 1>, scalar_prefetch = 1 : i64, scratch_operands = 1 : i64, tpu.core_type = #tpu.core_type<tc>, window_params = [{pipeline_mode = #tpu.pipeline_mode<synchronous>, transform_indices = @transform_0, window_bounds = array<i64: 2, 128>}, {transform_indices = @transform_1, window_bounds = array<i64: 1, 1, 3, 16, 16>}, {transform_indices = @transform_2, window_bounds = array<i64: 1, 3, 128>}]} {
    %0 = arith.index_cast %arg0 : i32 to index
    %c0 = arith.constant 0 : index
    %1 = memref.load %arg2[%0, %c0] : memref<3x2xi32, #tpu.memory_space<smem>>
    %2 = arith.index_cast %arg0 : i32 to index
    %c1 = arith.constant 1 : index
    %3 = memref.load %arg2[%2, %c1] : memref<3x2xi32, #tpu.memory_space<smem>>
    %c0_0 = arith.constant 0 : index
    %c0_1 = arith.constant 0 : index
    %4 = vector.load %arg3[%c0_0, %c0_1] : memref<2x128xi32, #tpu.memory_space<vmem>>, vector<1x128xi32>
    %c1_2 = arith.constant 1 : index
    %c0_3 = arith.constant 0 : index
    %5 = vector.load %arg3[%c1_2, %c0_3] : memref<2x128xi32, #tpu.memory_space<vmem>>, vector<1x128xi32>
    %6 = vector.broadcast %1 : i32 to vector<1x128xi32>
    %7 = arith.addi %4, %6 : vector<1x128xi32>
    %8 = vector.broadcast %3 : i32 to vector<1x128xi32>
    %9 = arith.addi %5, %8 : vector<1x128xi32>
    %c0_i32 = arith.constant 0 : i32
    %10 = arith.cmpi eq, %arg1, %c0_i32 : i32
    %11 = arith.extui %10 : i1 to i32
    %c0_i32_4 = arith.constant 0 : i32
    %12 = arith.cmpi ne, %11, %c0_i32_4 : i32
    scf.if %12 {
      %57 = tpu.iota {dimensions = array<i32: 0>} : vector<16x128xi32>
      %58 = vector.broadcast %7 : vector<1x128xi32> to vector<16x128xi32>
      %59 = arith.cmpi eq, %57, %58 : vector<16x128xi32>
      %60 = arith.extui %59 : vector<16x128xi1> to vector<16x128xi32>
      %61 = arith.sitofp %60 : vector<16x128xi32> to vector<16x128xf32>
      %c0_33 = arith.constant 0 : index
      %c0_34 = arith.constant 0 : index
      %62 = vector.load %arg6[%c0_33, %c0_34] : memref<16x128xf32, #tpu.memory_space<vmem>>, vector<16x128xf32>
      tpu.vector_store %arg6[%c0_33, %c0_34], %61 {strides = array<i32>} : memref<16x128xf32, #tpu.memory_space<vmem>>, vector<16x128xf32>,
      %cst_35 = arith.constant 0.000000e+00 : f32
      %63 = vector.broadcast %cst_35 : f32 to vector<3x128xf32>
      %c0_36 = arith.constant 0 : index
      %c0_37 = arith.constant 0 : index
      %c0_38 = arith.constant 0 : index
      %64 = vector.load %arg5[%c0_36, %c0_37, %c0_38] : memref<1x3x128xf32, #tpu.memory_space<vmem>>, vector<1x3x128xf32>
      %65 = vector.shape_cast %64 : vector<1x3x128xf32> to vector<3x128xf32>
      %66 = vector.shape_cast %63 : vector<3x128xf32> to vector<1x3x128xf32>
      tpu.vector_store %arg5[%c0_36, %c0_37, %c0_38], %66 {strides = array<i32>} : memref<1x3x128xf32, #tpu.memory_space<vmem>>, vector<1x3x128xf32>,
    } else {
    }
    %c0_5 = arith.constant 0 : index
    %c0_6 = arith.constant 0 : index
    %c0_7 = arith.constant 0 : index
    %c0_8 = arith.constant 0 : index
    %c0_9 = arith.constant 0 : index
    %13 = vector.load %arg4[%c0_5, %c0_6, %c0_7, %c0_8, %c0_9] : memref<1x1x3x16x16xf32, #tpu.memory_space<vmem>>, vector<1x1x3x16x16xf32>
    %14 = vector.shape_cast %13 : vector<1x1x3x16x16xf32> to vector<3x16x16xf32>
    %15 = vector.shape_cast %14 : vector<3x16x16xf32> to vector<48x16xf32>
    %c0_10 = arith.constant 0 : index
    %c0_11 = arith.constant 0 : index
    %16 = vector.load %arg6[%c0_10, %c0_11] : memref<16x128xf32, #tpu.memory_space<vmem>>, vector<16x128xf32>
    %cst = arith.constant dense<0.000000e+00> : vector<48x128xf32>
    %17 = tpu.matmul %15, %16, %cst {dimension_numbers = #tpu.dot_dimension_numbers<[1], [0], [0], [1], [0, 0, 1, 1], [], []>} : vector<48x16xf32>, vector<16x128xf32>, vector<48x128xf32> -> vector<48x128xf32>
    %c16_i32 = arith.constant 16 : i32
    %18 = arith.muli %arg1, %c16_i32 : i32
    %c0_i32_12 = arith.constant 0 : i32
    %19 = arith.addi %c0_i32_12, %18 : i32
    %20 = vector.broadcast %19 : i32 to vector<1x128xi32>
    %21 = arith.subi %9, %20 : vector<1x128xi32>
    %22 = tpu.iota {dimensions = array<i32: 0>} : vector<16x128xi32>
    %23 = vector.broadcast %21 : vector<1x128xi32> to vector<16x128xi32>
    %24 = arith.cmpi eq, %22, %23 : vector<16x128xi32>
    %25 = arith.extui %24 : vector<16x128xi1> to vector<16x128xi32>
    %26 = arith.sitofp %25 : vector<16x128xi32> to vector<16x128xf32>
    %27 = vector.extract_strided_slice %17 {offsets = [0, 0], sizes = [16, 128], strides = [1, 1]} : vector<48x128xf32> to vector<16x128xf32>
    %28 = arith.mulf %27, %26 : vector<16x128xf32>
    %c0_13 = arith.constant 0 : index
    %c0_14 = arith.constant 0 : index
    %c0_15 = arith.constant 0 : index
    %29 = vector.load %arg5[%c0_13, %c0_14, %c0_15] : memref<1x3x128xf32, #tpu.memory_space<vmem>>, vector<1x1x128xf32>
    %30 = vector.shape_cast %29 : vector<1x1x128xf32> to vector<1x128xf32>
    %cst_16 = arith.constant dense<0.000000e+00> : vector<128xf32>
    %31 = vector.multi_reduction <add>, %28, %cst_16 [0] : vector<16x128xf32> to vector<128xf32>
    %32 = vector.shape_cast %31 : vector<128xf32> to vector<1x128xf32>
    %33 = arith.addf %30, %32 : vector<1x128xf32>
    %c0_17 = arith.constant 0 : index
    %c0_18 = arith.constant 0 : index
    %c0_19 = arith.constant 0 : index
    %34 = vector.load %arg5[%c0_17, %c0_18, %c0_19] : memref<1x3x128xf32, #tpu.memory_space<vmem>>, vector<1x1x128xf32>
    %35 = vector.shape_cast %34 : vector<1x1x128xf32> to vector<1x128xf32>
    %36 = vector.shape_cast %33 : vector<1x128xf32> to vector<1x1x128xf32>
    tpu.vector_store %arg5[%c0_17, %c0_18, %c0_19], %36 {strides = array<i32>} : memref<1x3x128xf32, #tpu.memory_space<vmem>>, vector<1x1x128xf32>,
    %37 = vector.extract_strided_slice %17 {offsets = [16, 0], sizes = [16, 128], strides = [1, 1]} : vector<48x128xf32> to vector<16x128xf32>
    %38 = arith.mulf %37, %26 : vector<16x128xf32>
    %c0_20 = arith.constant 0 : index
    %c1_21 = arith.constant 1 : index
    %c0_22 = arith.constant 0 : index
    %39 = vector.load %arg5[%c0_20, %c1_21, %c0_22] : memref<1x3x128xf32, #tpu.memory_space<vmem>>, vector<1x1x128xf32>
    %40 = vector.shape_cast %39 : vector<1x1x128xf32> to vector<1x128xf32>
    %cst_23 = arith.constant dense<0.000000e+00> : vector<128xf32>
    %41 = vector.multi_reduction <add>, %38, %cst_23 [0] : vector<16x128xf32> to vector<128xf32>
    %42 = vector.shape_cast %41 : vector<128xf32> to vector<1x128xf32>
    %43 = arith.addf %40, %42 : vector<1x128xf32>
    %c0_24 = arith.constant 0 : index
    %c1_25 = arith.constant 1 : index
    %c0_26 = arith.constant 0 : index
    %44 = vector.load %arg5[%c0_24, %c1_25, %c0_26] : memref<1x3x128xf32, #tpu.memory_space<vmem>>, vector<1x1x128xf32>
    %45 = vector.shape_cast %44 : vector<1x1x128xf32> to vector<1x128xf32>
    %46 = vector.shape_cast %43 : vector<1x128xf32> to vector<1x1x128xf32>
    tpu.vector_store %arg5[%c0_24, %c1_25, %c0_26], %46 {strides = array<i32>} : memref<1x3x128xf32, #tpu.memory_space<vmem>>, vector<1x1x128xf32>,
    %47 = vector.extract_strided_slice %17 {offsets = [32, 0], sizes = [16, 128], strides = [1, 1]} : vector<48x128xf32> to vector<16x128xf32>
    %48 = arith.mulf %47, %26 : vector<16x128xf32>
    %c0_27 = arith.constant 0 : index
    %c2 = arith.constant 2 : index
    %c0_28 = arith.constant 0 : index
    %49 = vector.load %arg5[%c0_27, %c2, %c0_28] : memref<1x3x128xf32, #tpu.memory_space<vmem>>, vector<1x1x128xf32>
    %50 = vector.shape_cast %49 : vector<1x1x128xf32> to vector<1x128xf32>
    %cst_29 = arith.constant dense<0.000000e+00> : vector<128xf32>
    %51 = vector.multi_reduction <add>, %48, %cst_29 [0] : vector<16x128xf32> to vector<128xf32>
    %52 = vector.shape_cast %51 : vector<128xf32> to vector<1x128xf32>
    %53 = arith.addf %50, %52 : vector<1x128xf32>
    %c0_30 = arith.constant 0 : index
    %c2_31 = arith.constant 2 : index
    %c0_32 = arith.constant 0 : index
    %54 = vector.load %arg5[%c0_30, %c2_31, %c0_32] : memref<1x3x128xf32, #tpu.memory_space<vmem>>, vector<1x1x128xf32>
    %55 = vector.shape_cast %54 : vector<1x1x128xf32> to vector<1x128xf32>
    %56 = vector.shape_cast %53 : vector<1x128xf32> to vector<1x1x128xf32>
    tpu.vector_store %arg5[%c0_30, %c2_31, %c0_32], %56 {strides = array<i32>} : memref<1x3x128xf32, #tpu.memory_space<vmem>>, vector<1x1x128xf32>,
    return
  }
  func.func @transform_0(%arg0: i32, %arg1: i32, %arg2: memref<3x2xi32, #tpu.memory_space<smem>>) -> (i32, i32) {
    %c0_i32 = arith.constant 0 : i32
    %c0_i32_0 = arith.constant 0 : i32
    %c0_i32_1 = arith.constant 0 : i32
    return %c0_i32, %c0_i32_0 : i32, i32
  }
  func.func @transform_1(%arg0: i32, %arg1: i32, %arg2: memref<3x2xi32, #tpu.memory_space<smem>>) -> (i32, i32, i32, i32, i32) {
    %0 = arith.index_cast %arg0 : i32 to index
    %c1 = arith.constant 1 : index
    %1 = memref.load %arg2[%0, %c1] : memref<3x2xi32, #tpu.memory_space<smem>>
    %c0_i32 = arith.constant 0 : i32
    %2 = arith.addi %c0_i32, %arg1 : i32
    %c1_i32 = arith.constant 1 : i32
    %c0_i32_0 = arith.constant 0 : i32
    %c0_i32_1 = arith.constant 0 : i32
    %c0_i32_2 = arith.constant 0 : i32
    return %arg0, %c1_i32, %c0_i32_0, %2, %c0_i32_1 : i32, i32, i32, i32, i32
  }
  func.func @transform_2(%arg0: i32, %arg1: i32, %arg2: memref<3x2xi32, #tpu.memory_space<smem>>) -> (i32, i32, i32) {
    %c0_i32 = arith.constant 0 : i32
    %c0_i32_0 = arith.constant 0 : i32
    %c0_i32_1 = arith.constant 0 : i32
    return %arg0, %c0_i32, %c0_i32_0 : i32, i32, i32
  }
}

</mosaic_0001>

<llo_original>
// kernel: tpu_custom_call.1
$region0: #{tpu_custom_call.1}
  #allocation0 [shape = 'u32[]', space=smem, size = 0x4, offset = 0x4, fixed_abs, tag = 'smem constant byte address 0x4 - core index']
  #allocation1 [shape = 'u32[144,128]{1,0:T(1,128)}', space=vmem, size = 0x12000, scoped, tag = 'internal scratch']
  #allocation2 [shape = 'f32[16,128]{1,0:T(8,128)}', space=vmem, size = 0x2000, scoped, tag = 'scratch operand']
  #allocation3 [shape = 's32[1]{0}', space=sflag, size = 0x4, scoped, tag = 'scoped memory for tpu_custom_call.1']
  #allocation4 [shape = 'u8[2048]{0}', space=smem, size = 0x800, scoped, tag = 'prefetched SMEM operand 0']
  %s0 = inlined_call_operand.vmem [shape: s32[3,2], index: 0, kind: input, shape index: {}]
  %s1 = inlined_call_operand.vmem [shape: s32[2,128], index: 1, kind: input, shape index: {}]
  %s2 = inlined_call_operand.hbm [shape: f32[3,2,3,16,16], index: 2, kind: input, shape index: {}]
  %s3 = inlined_call_operand.hbm [shape: f32[3,3,128], index: 3, kind: output, shape index: {}]
  %s4 = sld [smem:[#allocation0]]
  $region49: #{tpu_custom_call.1} parent=0
    _
  %s6 = ssub.s32 1, %s4
  %s7 = scalar_select 0, %s6, %s4
  %s8 = sshll.u32 %s0, 4
  %s9 = int_to_ptr.vmem [resolvable:$true] %s8
  %11 = dma.vmem_to_smem %s9, 64, [#allocation4], [#allocation3]
  %12 = dma.done [#allocation3], 64
  %13 = sfence
  $region1: #{tpu_custom_call.1} parent=0
    #allocation5 [shape = 'u8[49152]{0}', space=vmem, size = 0xc000, scoped, tag = 'input window, operand 2']
    #allocation6 [shape = 's32[2]{0}', space=sflag, size = 0x8, scoped, tag = 'scoped memory for tpu_custom_call.1']
    #allocation7 [shape = 's32[2]{0}', space=sflag, size = 0x8, scoped, tag = 'scoped memory for tpu_custom_call.1']
    #allocation8 [shape = 'u8[4096]{0}', space=vmem, size = 0x1000, scoped, tag = 'output window, operand 0']
    %14 = vsyncpa [#allocation6], 0
    %s15 = scalar_lea.sflag [#allocation6], 1
    %16 = vsyncpa %s15, 0
    %17 = vsyncpa [#allocation7], 0
    %s18 = scalar_lea.sflag [#allocation7], 1
    %19 = vsyncpa %s18, 0
    loop: start=0, step=1, limit=5
    $region2: #{tpu_custom_call.1} parent=1 // loop_pre_header
      _
    $region3: #{tpu_custom_call.1} parent=1 // loop_header
      %s21 = sphi 0, %s25
      %p22 = scmp.ge.s32.totalorder %s21, 5
      %s28 = sphi 0, %s40
      %s29 = sphi 0, %s36
      %s30 = sphi 0, %s28
      %s31 = sphi 0, %s29
      %s32 = sphi 0, %s30
      %s33 = sphi 0, %s31
      %s41 = sphi 0, %s41
      %s43 = sphi 0, %s41
      %s44 = sphi 0, %s43
      %s58 = sphi 0, %s44
      %s66 = sphi 0, %s68
      %s69 = sphi 0, %s66
      %s70 = sphi 0, %s69
      %s86 = sphi 0, %s70
      %s92 = sphi 0, %s94
      %s95 = sphi 0, %s92
      %s96 = sphi 0, %s95
      %s112 = sphi 0, %s96
    $region4: #{tpu_custom_call.1} parent=1 // loop_header_branch
      %24 = sbr.rel (%p22) target = $region8
    $region5: #{tpu_custom_call.1} parent=1 // loop_body
      %s26 = ssub.s32 %s21, 1
      %s27 = ssub.s32 %s21, 2
      %s34 = sadd.s32 1, %s29
      %p35 = scmp.ge.s32.totalorder %s34, 1
      %s36 = scalar_select %p35, 0, %s34
      %s37 = sadd.s32 1, %s28
      %s38 = scalar_select %p35, %s37, %s28
      %p39 = scmp.ge.s32.totalorder %s38, 3
      %s40 = scalar_select %p39, 0, %s38
      %s42 = sadd.s32 %s41, 1
      %p45 = scmp.eq.s32.totalorder %s21, 2
      %p46 = scmp.ne.s32.totalorder %s41, %s43
      %p47 = scmp.eq.s32.totalorder %s21, 0
      %p48 = por %p46, %p47
      %p49 = scmp.ne.s32.totalorder %s41, %s43
      %p50 = scmp.eq.s32.totalorder %s26, 2
      %p51 = por %p49, %p50
      %p52 = scmp.ne.s32.totalorder %s43, %s44
      %p53 = scmp.eq.s32.totalorder %s26, 0
      %p54 = por %p52, %p53
      %p55 = scmp.ne.s32.totalorder %s43, %s44
      %p56 = scmp.eq.s32.totalorder %s27, 2
      %p57 = por %p55, %p56
      %p59 = scmp.ne.s32.totalorder %s44, %s58
      %p60 = scmp.eq.s32.totalorder %s27, 0
      %p61 = por %p59, %p60
      %s62 = ssub.s32 %s28, %s40
      %s63 = ssub.s32 %s29, %s36
      %s64 = sor.u32 %s62, %s63
      %p65 = scmp.eq.s32.totalorder %s64, 0
      %s67 = sadd.s32 %s66, 1
      %s68 = scalar_select %p65, %s66, %s67
      %p71 = pneg %p65
      %p72 = scmp.eq.s32.totalorder %s21, 2
      %p73 = por %p71, %p72
      %p74 = scmp.ne.s32.totalorder %s66, %s69
      %p75 = scmp.eq.s32.totalorder %s21, 0
      %p76 = por %p74, %p75
      %p77 = scmp.ne.s32.totalorder %s66, %s69
      %p78 = scmp.eq.s32.totalorder %s26, 2
      %p79 = por %p77, %p78
      %p80 = scmp.ne.s32.totalorder %s69, %s70
      %p81 = scmp.eq.s32.totalorder %s26, 0
      %p82 = por %p80, %p81
      %p83 = scmp.ne.s32.totalorder %s69, %s70
      %p84 = scmp.eq.s32.totalorder %s27, 2
      %p85 = por %p83, %p84
      %p87 = scmp.ne.s32.totalorder %s70, %s86
      %p88 = scmp.eq.s32.totalorder %s27, 0
      %p89 = por %p87, %p88
      %s90 = ssub.s32 %s28, %s40
      %p91 = scmp.eq.s32.totalorder %s90, 0
      %s93 = sadd.s32 %s92, 1
      %s94 = scalar_select %p91, %s92, %s93
      %p97 = pneg %p91
      %p98 = scmp.eq.s32.totalorder %s21, 2
      %p99 = por %p97, %p98
      %p100 = scmp.ne.s32.totalorder %s92, %s95
      %p101 = scmp.eq.s32.totalorder %s21, 0
      %p102 = por %p100, %p101
      %p103 = scmp.ne.s32.totalorder %s92, %s95
      %p104 = scmp.eq.s32.totalorder %s26, 2
      %p105 = por %p103, %p104
      %p106 = scmp.ne.s32.totalorder %s95, %s96
      %p107 = scmp.eq.s32.totalorder %s26, 0
      %p108 = por %p106, %p107
      %p109 = scmp.ne.s32.totalorder %s95, %s96
      %p110 = scmp.eq.s32.totalorder %s27, 2
      %p111 = por %p109, %p110
      %p113 = scmp.ne.s32.totalorder %s96, %s112
      %p114 = scmp.eq.s32.totalorder %s27, 0
      %p115 = por %p113, %p114
      %p116 = scmp.le.s32.totalorder 1, %s21
      %p117 = scmp.lt.s32.totalorder %s21, 4
      %p118 = pnand %p116, %p117
      %p119 = pneg %p118
      // Predicated region
      $region9: #{tpu_custom_call.1} parent=5 // pred_check
        _
      $region10: #{tpu_custom_call.1} parent=5 // pred_check_branch
        %121 = sbr.rel (%p118) target = $region12
      $region11: #{tpu_custom_call.1} parent=5 // pred_region
        %s122 = ssub.s32 %s21, 1
        // Predicated region
        $region13: #{tpu_custom_call.1} parent=11 // pred_check
          %p123 = pneg %p54
        $region14: #{tpu_custom_call.1} parent=11 // pred_check_branch
          %125 = sbr.rel (%p123) target = $region16
        $region15: #{tpu_custom_call.1} parent=11 // pred_region
          _
        $region16: #{tpu_custom_call.1} parent=11 // pred_fallthru
          _
      $region12: #{tpu_custom_call.1} parent=5 // pred_fallthru
        _
      %p126 = scmp.lt.s32.totalorder %s21, 3
      // Predicated region
      $region17: #{tpu_custom_call.1} parent=5 // pred_check
        %p127 = pneg %p126
      $region18: #{tpu_custom_call.1} parent=5 // pred_check_branch
        %129 = sbr.rel (%p127) target = $region20
      $region19: #{tpu_custom_call.1} parent=5 // pred_region
        // Predicated region
        $region21: #{tpu_custom_call.1} parent=19 // pred_check
          %p130 = pneg %p76
        $region22: #{tpu_custom_call.1} parent=19 // pred_check_branch
          %132 = sbr.rel (%p130) target = $region24
        $region23: #{tpu_custom_call.1} parent=19 // pred_region
          %s133 = sand.u32 %s66, 1
          %s134 = scalar_lea.sflag [#allocation6], %s133
          %s135 = sand.u32 %s66, 1
          %s136 = smul.addr %s135, 48
          %s137 = scalar_lea.vmem [#allocation5], %s136
          %s138 = smul.u32 2, %s29
          %s140 = ssub.s32 768, 768
          %141 = vsyncadd %s134, %s140
          %s142 = sadd.s32 %s138, 6
          %s143 = smul.addr %s28, 12
          %s144 = sadd.s32 %s142, %s143
          %s145 = smul.addr %s144, 128
          %s146 = scalar_lea.hbm %s2, %s145
          %s147 = sshll.u32 %s137, 4
          %s148 = int_to_ptr.vmem [resolvable:$true] %s147
          %153 = dma.hbm_to_vmem [thread:$0]  %s146, 768, %s148, %s134, 128, 128, 8
        $region24: #{tpu_custom_call.1} parent=19 // pred_fallthru
          _
      $region20: #{tpu_custom_call.1} parent=5 // pred_fallthru
        _
      %p154 = scmp.le.s32.totalorder 1, %s21
      %p155 = scmp.lt.s32.totalorder %s21, 4
      %p156 = pnand %p154, %p155
      %p157 = pneg %p156
      // Predicated region
      $region25: #{tpu_custom_call.1} parent=5 // pred_check
        _
      $region26: #{tpu_custom_call.1} parent=5 // pred_check_branch
        %159 = sbr.rel (%p156) target = $region28
      $region27: #{tpu_custom_call.1} parent=5 // pred_region
        %s160 = ssub.s32 %s21, 1
        %s161 = sand.u32 %s69, 1
        %s162 = scalar_lea.sflag [#allocation6], %s161
        %s163 = sand.u32 %s69, 1
        %s164 = smul.addr %s163, 48
        %s165 = scalar_lea.vmem [#allocation5], %s164
        // Predicated region
        $region29: #{tpu_custom_call.1} parent=27 // pred_check
          %p166 = pneg %p82
        $region30: #{tpu_custom_call.1} parent=27 // pred_check_branch
          %168 = sbr.rel (%p166) target = $region32
        $region31: #{tpu_custom_call.1} parent=27 // pred_region
          %169 = dma.done %s162, 768
        $region32: #{tpu_custom_call.1} parent=27 // pred_fallthru
          _
        %p170 = pneg %p54
        %p171 = pneg %p51
        %s172 = sand.u32 %s69, 1
        %s173 = scalar_lea.sflag [#allocation6], %s172
        %s174 = sand.u32 %s69, 1
        %s175 = smul.addr %s174, 48
        %s176 = scalar_lea.vmem [#allocation5], %s175
        %p177 = pneg %p82
        %p178 = pneg %p79
        %p179 = pneg %p108
        %p180 = pneg %p105
        %s181 = sand.u32 %s95, 1
        %s182 = scalar_lea.sflag [#allocation7], %s181
        %s183 = sand.u32 %s95, 1
        %s184 = smul.addr %s183, 4
        %s185 = scalar_lea.vmem [#allocation8], %s184
        %s186 = smul.u32 2, %s31
        %s187 = smul.u32 %s30, 128
        %s188 = sld [smem:[#allocation4 + %s187]]
        %s189 = sadd.s32 %s187, 1
        %s190 = sld [smem:[#allocation4 + %s189]]
        %v191 = vld [vmem:[%s1] sm:$0x1]
        %v192 = vld [vmem:[%s1 + $0x1] sm:$0x1]
        %v193 = vstv %s188
        %v194 = vadd.s32 %v191, %v193
        %v195 = vstv %s190
        %v196 = vadd.s32 %v192, %v195
        %p197 = scmp.eq.s32.totalorder %s31, 0
        // Predicated region
        $region33: #{tpu_custom_call.1} parent=27 // pred_check
          %p198 = pneg %p197
        $region34: #{tpu_custom_call.1} parent=27 // pred_check_branch
          %200 = sbr.rel (%p198) target = $region36
        $region35: #{tpu_custom_call.1} parent=27 // pred_region
          %v201 = vlaneseq
          %v202 = vshrl.u32 %v201, 7
          %v203 = vadd.s32 %v202, 8
          %v204 = vlaneseq
          %v205 = vshrl.u32 %v204, 7
          %v206 = vsub.s32 0, %v205
          %v207 = vrot.slane %v194, %v206
          %vm208 = vcmp.eq.s32.totalorder %v202, %v207
          %vm209 = vcmp.eq.s32.totalorder %v203, %v207
          %v210 = vsel %vm208, 1, 0
          %v211 = vsel %vm209, 1, 0
          %v212 = vcvt.s32.f32 %v210
          %v213 = vcvt.s32.f32 %v211
          %214 = vst [vmem:[#allocation2] sm:$0xff] %v212
          %215 = vst [vmem:[#allocation2 + $0x8] sm:$0xff] %v213
          %216 = vst [vmem:[%s185] sm:$0x7] 0.0
        $region36: #{tpu_custom_call.1} parent=27 // pred_fallthru
          _
        %v217 = vld [vmem:[%s165] sm:$0xff]
        %v218 = vld [vmem:[%s165 + $0x8] sm:$0xff]
        %v219 = vld [vmem:[%s165 + $0x10] sm:$0xff]
        %v220 = vld [vmem:[%s165 + $0x18] sm:$0xff]
        %v221 = vld [vmem:[%s165 + $0x20] sm:$0xff]
        %v222 = vld [vmem:[%s165 + $0x28] sm:$0xff]
        %v223 = vld [vmem:[#allocation2] sm:$0xff]
        %v224 = vld [vmem:[#allocation2 + $0x8] sm:$0xff]
        %vm225 = vcmask 130048
        %v227 = vsel %vm225, %v217, 0
        %v230 = vsel %vm225, %v218, 0
        %v233 = vsel %vm225, %v219, 0
        %v236 = vsel %vm225, %v220, 0
        %v239 = vsel %vm225, %v221, 0
        %v242 = vsel %vm225, %v222, 0
        %244 = vmatprep.subr.mxu0 0.0
        %245 = vmatpush1.msra.mxu0 %v223
        %246 = vmatprep.subr.mxu0 0.0
        %247 = vmatpush1.msra.mxu0 %v224
        %248 = vmatprep.subr.mxu0 0.0
        %249 = vmatpush1.msra.mxu0 0.0
        %250 = vmatprep.subr.mxu0 0.0
        %251 = vmatpush1.msra.mxu0 0.0
        %252 = vmatprep.subr.mxu0 0.0
        %253 = vmatpush1.msra.mxu0 0.0
        %254 = vmatprep.subr.mxu0 0.0
        %255 = vmatpush1.msra.mxu0 0.0
        %256 = vmatprep.subr.mxu0 0.0
        %257 = vmatpush1.msra.mxu0 0.0
        %258 = vmatprep.subr.mxu0 0.0
        %259 = vmatpush1.msra.mxu0 0.0
        %260 = vmatprep.subr.mxu0 0.0
        %261 = vmatpush1.msra.mxu0 0.0
        %262 = vmatprep.subr.mxu0 0.0
        %263 = vmatpush1.msra.mxu0 0.0
        %264 = vmatprep.subr.mxu0 0.0
        %265 = vmatpush1.msra.mxu0 0.0
        %266 = vmatprep.subr.mxu0 0.0
        %267 = vmatpush1.msra.mxu0 0.0
        %268 = vmatprep.subr.mxu0 0.0
        %269 = vmatpush1.msra.mxu0 0.0
        %270 = vmatprep.subr.mxu0 0.0
        %271 = vmatpush1.msra.mxu0 0.0
        %272 = vmatprep.subr.mxu0 0.0
        %273 = vmatpush1.msra.mxu0 0.0
        %274 = vmatprep.subr.mxu0 0.0
        %275 = vmatpush1.msra.mxu0 0.0
        %276 = vmatprep.subr.mxu0 0.0
        %277 = vmatpush1.msra.mxu0 0.0
        %278 = vmatprep.subr.mxu0 0.0
        %279 = vmatpush1.msra.mxu0 0.0
        %280 = vmatprep.subr.mxu0 0.0
        %281 = vmatpush1.msra.mxu0 0.0
        %282 = vmatprep.subr.mxu0 0.0
        %283 = vmatpush1.msra.mxu0 0.0
        %284 = vmatprep.subr.mxu0 0.0
        %285 = vmatpush1.msra.mxu0 0.0
        %286 = vmatprep.subr.mxu0 0.0
        %287 = vmatpush1.msra.mxu0 0.0
        %288 = vmatprep.subr.mxu0 0.0
        %289 = vmatpush1.msra.mxu0 0.0
        %290 = vmatprep.subr.mxu0 0.0
        %291 = vmatpush1.msra.mxu0 0.0
        %292 = vmatprep.subr.mxu0 0.0
        %293 = vmatpush1.msra.mxu0 0.0
        %294 = vmatprep.subr.mxu0 0.0
        %295 = vmatpush1.msra.mxu0 0.0
        %296 = vmatprep.subr.mxu0 0.0
        %297 = vmatpush1.msra.mxu0 0.0
        %298 = vmatprep.subr.mxu0 0.0
        %299 = vmatpush1.msra.mxu0 0.0
        %300 = vmatprep.subr.mxu0 0.0
        %301 = vmatpush1.msra.mxu0 0.0
        %302 = vmatprep.subr.mxu0 0.0
        %303 = vmatpush1.msra.mxu0 0.0
        %304 = vmatprep.subr.mxu0 0.0
        %305 = vmatpush1.msra.mxu0 0.0
        %306 = vmatprep.subr.mxu0 0.0
        %307 = vmatpush1.msra.mxu0 0.0
        %308 = vmatprep.mubr.f32.mxu0 0.0
        %309 = vmatmul.mubr.f32.gmra.mrb[0].mxu0 %v227
        %v310 = vpop.f32.mrb[0].mxu0
        %v311 = vadd.f32 0.0, %v310
        %v312 = vpop.f32.mrb[0].mxu0
        %313 = vmatprep.mubr.f32.mxu0 0.0
        %314 = vmatmul.mubr.f32.gmra.mrb[0].mxu0 %v230
        %v315 = vpop.f32.mrb[0].mxu0
        %v316 = vadd.f32 0.0, %v315
        %v317 = vpop.f32.mrb[0].mxu0
        %318 = vmatprep.mubr.f32.mxu0 0.0
        %319 = vmatmul.mubr.f32.gmra.mrb[0].mxu0 %v233
        %v320 = vpop.f32.mrb[0].mxu0
        %v321 = vadd.f32 0.0, %v320
        %v322 = vpop.f32.mrb[0].mxu0
        %323 = vmatprep.mubr.f32.mxu0 0.0
        %324 = vmatmul.mubr.f32.gmra.mrb[0].mxu0 %v236
        %v325 = vpop.f32.mrb[0].mxu0
        %v326 = vadd.f32 0.0, %v325
        %v327 = vpop.f32.mrb[0].mxu0
        %328 = vmatprep.mubr.f32.mxu0 0.0
        %329 = vmatmul.mubr.f32.gmra.mrb[0].mxu0 %v239
        %v330 = vpop.f32.mrb[0].mxu0
        %v331 = vadd.f32 0.0, %v330
        %v332 = vpop.f32.mrb[0].mxu0
        %333 = vmatprep.mubr.f32.mxu0 0.0
        %334 = vmatmul.mubr.f32.gmra.mrb[0].mxu0 %v242
        %v335 = vpop.f32.mrb[0].mxu0
        %v336 = vadd.f32 0.0, %v335
        %v337 = vpop.f32.mrb[0].mxu0
        %338 = vdwg.mxu0
        %s339 = smul.u32 %s31, 16
        %v340 = vstv %s339
        %v341 = vsub.s32 %v196, %v340
        %v342 = vlaneseq
        %v343 = vshrl.u32 %v342, 7
        %v344 = vadd.s32 %v343, 8
        %v345 = vlaneseq
        %v346 = vshrl.u32 %v345, 7
        %v347 = vsub.s32 0, %v346
        %v348 = vrot.slane %v341, %v347
        %vm349 = vcmp.eq.s32.totalorder %v343, %v348
        %vm350 = vcmp.eq.s32.totalorder %v344, %v348
        %v351 = vsel %vm349, 1, 0
        %v352 = vsel %vm350, 1, 0
        %v353 = vcvt.s32.f32 %v351
        %v354 = vcvt.s32.f32 %v352
        %v355 = vmul.f32 %v311, %v353
        %v356 = vmul.f32 %v316, %v354
        %v357 = vld [vmem:[%s185] sm:$0x1]
        %v358 = vadd.f32 %v355, %v356
        %v359 = vrot.slane %v358, 4
        %v360 = vadd.f32 %v358, %v359
        %v361 = vrot.slane %v360, 2
        %v362 = vadd.f32 %v360, %v361
        %v363 = vrot.slane %v362, 1
        %v364 = vadd.f32 %v362, %v363
        %v365 = vadd.f32 %v357, %v364
        %366 = vst [vmem:[%s185] sm:$0x1] %v365
        %v367 = vmul.f32 %v321, %v353
        %v368 = vmul.f32 %v326, %v354
        %v369 = vld [vmem:[%s185 + $0x1] sm:$0x1]
        %v370 = vadd.f32 %v367, %v368
        %v371 = vrot.slane %v370, 4
        %v372 = vadd.f32 %v370, %v371
        %v373 = vrot.slane %v372, 2
        %v374 = vadd.f32 %v372, %v373
        %v375 = vrot.slane %v374, 1
        %v376 = vadd.f32 %v374, %v375
        %v377 = vadd.f32 %v369, %v376
        %378 = vst [vmem:[%s185 + $0x1] sm:$0x1] %v377
        %v379 = vmul.f32 %v331, %v353
        %v380 = vmul.f32 %v336, %v354
        %v381 = vld [vmem:[%s185 + $0x2] sm:$0x1]
        %v382 = vadd.f32 %v379, %v380
        %v383 = vrot.slane %v382, 4
        %v384 = vadd.f32 %v382, %v383
        %v385 = vrot.slane %v384, 2
        %v386 = vadd.f32 %v384, %v385
        %v387 = vrot.slane %v386, 1
        %v388 = vadd.f32 %v386, %v387
        %v389 = vadd.f32 %v381, %v388
        %390 = vst [vmem:[%s185 + $0x2] sm:$0x1] %v389
        %s391 = sand.u32 %s95, 1
        %s392 = scalar_lea.sflag [#allocation7], %s391
        %s393 = sand.u32 %s95, 1
        %s394 = smul.addr %s393, 4
        %s395 = scalar_lea.vmem [#allocation8], %s394
        // Predicated region
        $region37: #{tpu_custom_call.1} parent=27 // pred_check
          %p396 = pneg %p105
        $region38: #{tpu_custom_call.1} parent=27 // pred_check_branch
          %398 = sbr.rel (%p396) target = $region40
        $region39: #{tpu_custom_call.1} parent=27 // pred_region
          %s400 = ssub.s32 64, 64
          %401 = vsyncadd %s392, %s400
          %s402 = smul.addr %s30, 64
          %s403 = scalar_lea.hbm %s3, %s402
          %s405 = sshll.u32 %s395, 4
          %s406 = int_to_ptr.vmem [resolvable:$true] %s405
          %408 = dma.vmem_to_hbm [thread:$0]  %s406, 64, %s403, %s392
        $region40: #{tpu_custom_call.1} parent=27 // pred_fallthru
          _
      $region28: #{tpu_custom_call.1} parent=5 // pred_fallthru
        _
      %p409 = scmp.le.s32.totalorder 2, %s21
      // Predicated region
      $region41: #{tpu_custom_call.1} parent=5 // pred_check
        %p410 = pneg %p409
      $region42: #{tpu_custom_call.1} parent=5 // pred_check_branch
        %412 = sbr.rel (%p410) target = $region44
      $region43: #{tpu_custom_call.1} parent=5 // pred_region
        %s413 = ssub.s32 %s21, 2
        // Predicated region
        $region45: #{tpu_custom_call.1} parent=43 // pred_check
          %p414 = pneg %p111
        $region46: #{tpu_custom_call.1} parent=43 // pred_check_branch
          %416 = sbr.rel (%p414) target = $region48
        $region47: #{tpu_custom_call.1} parent=43 // pred_region
          %s417 = sand.u32 %s96, 1
          %s418 = scalar_lea.sflag [#allocation7], %s417
          %s419 = sand.u32 %s96, 1
          %s420 = smul.addr %s419, 4
          %s421 = scalar_lea.vmem [#allocation8], %s420
          %422 = dma.done %s418, 64
        $region48: #{tpu_custom_call.1} parent=43 // pred_fallthru
          _
      $region44: #{tpu_custom_call.1} parent=5 // pred_fallthru
        _
    $region6: #{tpu_custom_call.1} parent=1 // loop_footer
      %s25 = sadd.s32 1, %s21
    $region7: #{tpu_custom_call.1} parent=1 // loop_footer_branch
      %20 = sbr.rel target = $region3
    $region8: #{tpu_custom_call.1} parent=1 // loop_exit
      _
    %423 = vsyncpa [#allocation6], 1
    %s424 = scalar_lea.sflag [#allocation6], 1
    %425 = vsyncpa %s424, 1
    %426 = vsyncpa [#allocation7], 1
    %s427 = scalar_lea.sflag [#allocation7], 1
    %428 = vsyncpa %s427, 1

</llo_original>
